<compile_context>
chip_gen: v7x
topology: tpu7x:2x2x1
jax: 0.10.0
libtpu: 0.0.40
codegen_flags: <defaults>
</compile_context>

<pallas_src>
import jax
import jax.numpy as jnp
from jax.experimental import pallas as pl
from jax.experimental.pallas import tpu as pltpu


# ---------------------------------------------------------------------------
# Kernel: pure VPU broadcast-add. Works for both layouts:
#   seq-major : x (tp, B, D) + pe (tp, 1, D)   (broadcast over batch/sublanes)
#   batch-major: x (B, tp, D) + pe (tp, D)     (broadcast over leading batch)
# ---------------------------------------------------------------------------
def _add_pe_kernel(x_ref, pe_ref, o_ref):
    o_ref[...] = x_ref[...] + pe_ref[...]


def make_pe(d_model: int, max_len: int = 100, dtype=jnp.float32) -> jnp.ndarray:
    """(max_len, 1, d_model) positional-encoding buffer (matches the torch buffer).

    Build it once, in the model dtype, so the forward path never re-casts it.
    NOTE: odd d_model is guarded (cos fills only d_model//2 columns); the torch
    original shape-errors in that case.
    """
    position = jnp.arange(max_len, dtype=jnp.float32)[:, None]               # (L, 1)
    div_term = jnp.exp(
        jnp.arange(0, d_model, 2, dtype=jnp.float32)
        * (-jnp.log(jnp.float32(10000.0)) / d_model)
    )                                                                         # (ceil(D/2),)
    angles = position * div_term                                              # (L, ceil(D/2))
    pe = jnp.zeros((max_len, d_model), dtype=jnp.float32)
    pe = pe.at[:, 0::2].set(jnp.sin(angles))
    pe = pe.at[:, 1::2].set(jnp.cos(angles[:, : d_model // 2]))
    return pe[:, None, :].astype(dtype)   # unsqueeze(0).transpose(0,1) -> (L, 1, D)


# ---------------------------------------------------------------------------
# Tile picker (positions per grid step).
# ---------------------------------------------------------------------------
_MIN_TP = 8        # sublane granule for position tiles
_PREF_TP = 512     # v6e HBM-roofline plateau; don't shrink tiles below this just to add steps
_TARGET_STEPS = 8  # keep the grid long enough for v7x's 2 TCs + DMA/compute overlap


def _pick_tp(S: int, B: int, D: int, itemsize: int, block_bytes: int) -> int:
    # Per grid step VMEM: double-buffered x-in + out (tp*B*D each) + pe (tp*D).
    bytes_per_pos = (4 * B + 2) * D * itemsize
    tp = max(1, block_bytes // bytes_per_pos)
    # Prefer ~_TARGET_STEPS steps, but never shrink below the _PREF_TP plateau for it.
    tp = min(tp, max(pl.cdiv(S, _TARGET_STEPS), _PREF_TP))
    # ...and guarantee >= 2 steps whenever the sequence is big enough to split.
    tp = min(tp, max(pl.cdiv(S, 2), _MIN_TP))
    tp = min(tp, S)
    if S >= _MIN_TP:
        tp = max(_MIN_TP, (tp // _MIN_TP) * _MIN_TP)   # sublane-aligned position tiles
    else:
        tp = S
    return tp


# ---------------------------------------------------------------------------
# Torch-parity layout: x is (seq, batch, d_model).
# ---------------------------------------------------------------------------
def positional_encoding(x: jnp.ndarray, pe: jnp.ndarray, *,
                        block_bytes: int = 8 * 1024 * 1024,
                        in_place: bool = False) -> jnp.ndarray:
    """x: (S, B, D), pe: (L, 1, D) with L >= S. Returns x + pe[:S] (broadcast over batch)."""
    S, B, D = x.shape
    assert pe.ndim == 3 and pe.shape[1] == 1 and pe.shape[2] == D and pe.shape[0] >= S, (
        pe.shape, x.shape)
    if pe.dtype != x.dtype:           # fallback only; build pe in the model dtype (make_pe)
        pe = pe.astype(x.dtype)

    itemsize = jnp.dtype(x.dtype).itemsize
    tp = _pick_tp(S, B, D, itemsize, block_bytes)
    grid = (pl.cdiv(S, tp),)
    alias_kwargs = dict(input_output_aliases={0: 0}) if in_place else {}

    return pl.pallas_call(
        _add_pe_kernel,
        out_shape=jax.ShapeDtypeStruct((S, B, D), x.dtype),
        grid_spec=pltpu.PrefetchScalarGridSpec(
            num_scalar_prefetch=0,
            grid=grid,
            in_specs=[
                # x streamed in (tp, B, D) tiles.
                pl.BlockSpec((tp, B, D), lambda i: (i, 0, 0)),
                # pe streamed in matching (tp, 1, D) tiles — read once, bounded VMEM.
                pl.BlockSpec((tp, 1, D), lambda i: (i, 0, 0)),
            ],
            out_specs=pl.BlockSpec((tp, B, D), lambda i: (i, 0, 0)),
        ),
        compiler_params=pltpu.CompilerParams(
            dimension_semantics=("parallel",),
        ),
        **alias_kwargs,
    )(x, pe)


# ---------------------------------------------------------------------------
# Batch-major layout: x is (batch, seq, d_model) — sequence positions land on
# the sublane axis, so vregs are dense and stores unmasked even at tiny batch.
# ---------------------------------------------------------------------------
def positional_encoding_bsd(x: jnp.ndarray, pe: jnp.ndarray, *,
                            block_bytes: int = 8 * 1024 * 1024,
                            in_place: bool = False) -> jnp.ndarray:
    """x: (B, S, D), pe: (L, 1, D) with L >= S. Returns x + pe[:S] broadcast over batch."""
    B, S, D = x.shape
    assert pe.ndim == 3 and pe.shape[1] == 1 and pe.shape[2] == D and pe.shape[0] >= S, (
        pe.shape, x.shape)
    if pe.dtype != x.dtype:
        pe = pe.astype(x.dtype)
    pe2 = pe.reshape(pe.shape[0], D)          # (L, D); contiguous -> free view

    itemsize = jnp.dtype(x.dtype).itemsize
    tp = _pick_tp(S, B, D, itemsize, block_bytes)
    if tp % _MIN_TP != 0:
        # Tiny-S corner (tp == S < 8): the (8,128) rule then requires the pe
        # block's sublane dim to equal the full array dim, so trim pe to S rows.
        pe2 = pe2[:S]
    grid = (pl.cdiv(S, tp),)
    alias_kwargs = dict(input_output_aliases={0: 0}) if in_place else {}

    return pl.pallas_call(
        _add_pe_kernel,
        out_shape=jax.ShapeDtypeStruct((B, S, D), x.dtype),
        grid_spec=pltpu.PrefetchScalarGridSpec(
            num_scalar_prefetch=0,
            grid=grid,
            in_specs=[
                pl.BlockSpec((B, tp, D), lambda i: (0, i, 0)),
                pl.BlockSpec((tp, D), lambda i: (i, 0)),
            ],
            out_specs=pl.BlockSpec((B, tp, D), lambda i: (0, i, 0)),
        ),
        compiler_params=pltpu.CompilerParams(
            dimension_semantics=("parallel",),
        ),
        **alias_kwargs,
    )(x, pe2)


if __name__ == "__main__":
    # Small shapes consistent with the module: seq (= max_len) = 8, batch = 2, d_model = 32.
    SEQ, BATCH, D_MODEL = 8, 2, 32

    key = jax.random.PRNGKey(0)
    x = jax.random.normal(key, (SEQ, BATCH, D_MODEL), dtype=jnp.float32)

    pe = make_pe(D_MODEL, max_len=SEQ)          # torch forward requires max_len == seq
    ref = x + pe[:SEQ]                          # plain-JAX reference of the torch forward

    # Torch-parity (S, B, D) path.
    out = jax.block_until_ready(positional_encoding(x, pe))
    assert out.shape == (SEQ, BATCH, D_MODEL)
    assert jnp.allclose(out, ref, atol=1e-6), "sbd path mismatch vs reference"

    # Batch-major (B, S, D) path — dense-sublane layout recommended for small B.
    x_bsd = jnp.transpose(x, (1, 0, 2))
    out_bsd = jax.block_until_ready(positional_encoding_bsd(x_bsd, pe))
    assert out_bsd.shape == (BATCH, SEQ, D_MODEL)
    assert jnp.allclose(out_bsd, jnp.transpose(ref, (1, 0, 2)), atol=1e-6), "bsd path mismatch"

    print("KERNEL_OK")
</pallas_src>

<mosaic_0001>
module attributes {stable_mosaic.version = 11 : i64} {
  func.func @_add_pe_kernel(%arg0: i32, %arg1: memref<8x2x32xf32, #tpu.memory_space<vmem>>, %arg2: memref<8x1x32xf32, #tpu.memory_space<vmem>>, %arg3: memref<8x2x32xf32, #tpu.memory_space<vmem>>) attributes {dimension_semantics = [#tpu.dimension_semantics<parallel>], iteration_bounds = array<i64: 1>, scalar_prefetch = 0 : i64, scratch_operands = 0 : i64, tpu.core_type = #tpu.core_type<tc>, window_params = [{transform_indices = @transform_0, window_bounds = array<i64: 8, 2, 32>}, {transform_indices = @transform_1, window_bounds = array<i64: 8, 1, 32>}, {transform_indices = @transform_2, window_bounds = array<i64: 8, 2, 32>}]} {
    %c0 = arith.constant 0 : index
    %c0_0 = arith.constant 0 : index
    %c0_1 = arith.constant 0 : index
    %0 = vector.load %arg1[%c0, %c0_0, %c0_1] : memref<8x2x32xf32, #tpu.memory_space<vmem>>, vector<8x2x32xf32>
    %c0_2 = arith.constant 0 : index
    %c0_3 = arith.constant 0 : index
    %c0_4 = arith.constant 0 : index
    %1 = vector.load %arg2[%c0_2, %c0_3, %c0_4] : memref<8x1x32xf32, #tpu.memory_space<vmem>>, vector<8x1x32xf32>
    %2 = vector.broadcast %1 : vector<8x1x32xf32> to vector<8x2x32xf32>
    %3 = arith.addf %0, %2 : vector<8x2x32xf32>
    %c0_5 = arith.constant 0 : index
    %c0_6 = arith.constant 0 : index
    %c0_7 = arith.constant 0 : index
    %4 = vector.load %arg3[%c0_5, %c0_6, %c0_7] : memref<8x2x32xf32, #tpu.memory_space<vmem>>, vector<8x2x32xf32>
    tpu.vector_store %arg3[%c0_5, %c0_6, %c0_7], %3 {strides = array<i32>} : memref<8x2x32xf32, #tpu.memory_space<vmem>>, vector<8x2x32xf32>,
    return
  }
  func.func @transform_0(%arg0: i32) -> (i32, i32, i32) {
    %c0_i32 = arith.constant 0 : i32
    %c0_i32_0 = arith.constant 0 : i32
    %c0_i32_1 = arith.constant 0 : i32
    return %arg0, %c0_i32, %c0_i32_0 : i32, i32, i32
  }
  func.func @transform_1(%arg0: i32) -> (i32, i32, i32) {
    %c0_i32 = arith.constant 0 : i32
    %c0_i32_0 = arith.constant 0 : i32
    %c0_i32_1 = arith.constant 0 : i32
    return %arg0, %c0_i32, %c0_i32_0 : i32, i32, i32
  }
  func.func @transform_2(%arg0: i32) -> (i32, i32, i32) {
    %c0_i32 = arith.constant 0 : i32
    %c0_i32_0 = arith.constant 0 : i32
    %c0_i32_1 = arith.constant 0 : i32
    return %arg0, %c0_i32, %c0_i32_0 : i32, i32, i32
  }
}

</mosaic_0001>

<llo_original>
// kernel: tpu_custom_call.1
$region0: #{tpu_custom_call.1}
  #allocation0 [shape = 'u32[]', space=smem, size = 0x4, offset = 0x4, fixed_abs, tag = 'smem constant byte address 0x4 - core index']
  #allocation1 [shape = 'u32[144,128]{1,0:T(1,128)}', space=vmem, size = 0x12000, scoped, tag = 'internal scratch']
  %s0 = inlined_call_operand.hbm [shape: f32[8,2,32], index: 0, kind: input, shape index: {}]
  %s1 = inlined_call_operand.hbm [shape: f32[8,1,32], index: 1, kind: input, shape index: {}]
  %s2 = inlined_call_operand.hbm [shape: f32[8,2,32], index: 2, kind: output, shape index: {}]
  %s3 = sld [smem:[#allocation0]]
  $region26: #{tpu_custom_call.1} parent=0
    _
  %s5 = ssub.s32 1, %s3
  %s6 = scalar_select 0, %s5, %s3
  $region1: #{tpu_custom_call.1} parent=0
    #allocation2 [shape = 'u8[8192]{0}', space=vmem, size = 0x2000, scoped, tag = 'input window, operand 0, single buffered']
    #allocation3 [shape = 's32[1]{0}', space=sflag, size = 0x4, scoped, tag = 'scoped memory for tpu_custom_call.1']
    #allocation4 [shape = 's32[1]{0}', space=sflag, size = 0x4, scoped, tag = 'scoped memory for tpu_custom_call.1']
    #allocation5 [shape = 'u8[4096]{0}', space=vmem, size = 0x1000, scoped, tag = 'input window, operand 1, single buffered']
    #allocation6 [shape = 's32[1]{0}', space=sflag, size = 0x4, scoped, tag = 'scoped memory for tpu_custom_call.1']
    #allocation7 [shape = 'u8[8192]{0}', space=vmem, size = 0x2000, scoped, tag = 'output window, operand 0, single buffered']
    %7 = vsyncpa [#allocation3], 0
    %8 = vsyncpa [#allocation6], 0
    %9 = vsyncpa [#allocation4], 0
    // Predicated region
    $region2: #{tpu_custom_call.1} parent=1 // pred_check
      _
    $region3: #{tpu_custom_call.1} parent=1 // pred_check_branch
      %11 = sbr.rel (0) target = $region5
    $region4: #{tpu_custom_call.1} parent=1 // pred_region
      %s13 = ssub.s32 256, 256
      %14 = vsyncadd [#allocation3], %s13
      %s15 = sshll.u32 [#allocation2], 4
      %s16 = int_to_ptr.vmem [resolvable:$true] %s15
      %21 = dma.hbm_to_vmem [thread:$0]  %s0, 256, %s16, [#allocation3], 32, 32, 2
    $region5: #{tpu_custom_call.1} parent=1 // pred_fallthru
      _
    // Predicated region
    $region6: #{tpu_custom_call.1} parent=1 // pred_check
      _
    $region7: #{tpu_custom_call.1} parent=1 // pred_check_branch
      %23 = sbr.rel (0) target = $region9
    $region8: #{tpu_custom_call.1} parent=1 // pred_region
      %s25 = ssub.s32 128, 128
      %26 = vsyncadd [#allocation6], %s25
      %s27 = sshll.u32 [#allocation5], 4
      %s28 = int_to_ptr.vmem [resolvable:$true] %s27
      %33 = dma.hbm_to_vmem [thread:$0]  %s1, 128, %s28, [#allocation6], 16, 16, 1
    $region9: #{tpu_custom_call.1} parent=1 // pred_fallthru
      _
    // Predicated region
    $region10: #{tpu_custom_call.1} parent=1 // pred_check
      _
    $region11: #{tpu_custom_call.1} parent=1 // pred_check_branch
      %35 = sbr.rel (0) target = $region13
    $region12: #{tpu_custom_call.1} parent=1 // pred_region
      %36 = dma.done [#allocation3], 256
    $region13: #{tpu_custom_call.1} parent=1 // pred_fallthru
      _
    // Predicated region
    $region14: #{tpu_custom_call.1} parent=1 // pred_check
      _
    $region15: #{tpu_custom_call.1} parent=1 // pred_check_branch
      %38 = sbr.rel (0) target = $region17
    $region16: #{tpu_custom_call.1} parent=1 // pred_region
      %39 = dma.done [#allocation6], 128
    $region17: #{tpu_custom_call.1} parent=1 // pred_fallthru
      _
    %v40 = vld [vmem:[#allocation2] sm:$0x3]
    %v41 = vld [vmem:[#allocation2 + $0x2] sm:$0x3]
    %v42 = vld [vmem:[#allocation2 + $0x4] sm:$0x3]
    %v43 = vld [vmem:[#allocation2 + $0x6] sm:$0x3]
    %v44 = vld [vmem:[#allocation2 + $0x8] sm:$0x3]
    %v45 = vld [vmem:[#allocation2 + $0xa] sm:$0x3]
    %v46 = vld [vmem:[#allocation2 + $0xc] sm:$0x3]
    %v47 = vld [vmem:[#allocation2 + $0xe] sm:$0x3]
    %v48 = vld [vmem:[#allocation5] sm:$0x1]
    %v49 = vld [vmem:[#allocation5 + $0x1] sm:$0x1]
    %v50 = vld [vmem:[#allocation5 + $0x2] sm:$0x1]
    %v51 = vld [vmem:[#allocation5 + $0x3] sm:$0x1]
    %v52 = vld [vmem:[#allocation5 + $0x4] sm:$0x1]
    %v53 = vld [vmem:[#allocation5 + $0x5] sm:$0x1]
    %v54 = vld [vmem:[#allocation5 + $0x6] sm:$0x1]
    %v55 = vld [vmem:[#allocation5 + $0x7] sm:$0x1]
    %v64 = vlaneseq
    %v65 = vshrl.u32 %v64, 7
    %v66 = vsub.s32 0, %v65
    %v67 = vrot.slane %v48, %v66
    %v68 = vlaneseq
    %v69 = vshrl.u32 %v68, 7
    %v70 = vsub.s32 0, %v69
    %v71 = vrot.slane %v49, %v70
    %v72 = vlaneseq
    %v73 = vshrl.u32 %v72, 7
    %v74 = vsub.s32 0, %v73
    %v75 = vrot.slane %v50, %v74
    %v76 = vlaneseq
    %v77 = vshrl.u32 %v76, 7
    %v78 = vsub.s32 0, %v77
    %v79 = vrot.slane %v51, %v78
    %v80 = vlaneseq
    %v81 = vshrl.u32 %v80, 7
    %v82 = vsub.s32 0, %v81
    %v83 = vrot.slane %v52, %v82
    %v84 = vlaneseq
    %v85 = vshrl.u32 %v84, 7
    %v86 = vsub.s32 0, %v85
    %v87 = vrot.slane %v53, %v86
    %v88 = vlaneseq
    %v89 = vshrl.u32 %v88, 7
    %v90 = vsub.s32 0, %v89
    %v91 = vrot.slane %v54, %v90
    %v92 = vlaneseq
    %v93 = vshrl.u32 %v92, 7
    %v94 = vsub.s32 0, %v93
    %v95 = vrot.slane %v55, %v94
    %v104 = vadd.f32 %v40, %v67
    %v105 = vadd.f32 %v41, %v71
    %v106 = vadd.f32 %v42, %v75
    %v107 = vadd.f32 %v43, %v79
    %v108 = vadd.f32 %v44, %v83
    %v109 = vadd.f32 %v45, %v87
    %v110 = vadd.f32 %v46, %v91
    %v111 = vadd.f32 %v47, %v95
    %vm112 = vcmask 254976
    %113 = vst.msk [vmem:[#allocation7] sm:$0x3] %vm112, %v104
    %114 = vst.msk [vmem:[#allocation7 + $0x2] sm:$0x3] %vm112, %v105
    %115 = vst.msk [vmem:[#allocation7 + $0x4] sm:$0x3] %vm112, %v106
    %116 = vst.msk [vmem:[#allocation7 + $0x6] sm:$0x3] %vm112, %v107
    %117 = vst.msk [vmem:[#allocation7 + $0x8] sm:$0x3] %vm112, %v108
    %118 = vst.msk [vmem:[#allocation7 + $0xa] sm:$0x3] %vm112, %v109
    %119 = vst.msk [vmem:[#allocation7 + $0xc] sm:$0x3] %vm112, %v110
    %120 = vst.msk [vmem:[#allocation7 + $0xe] sm:$0x3] %vm112, %v111
    // Predicated region
    $region18: #{tpu_custom_call.1} parent=1 // pred_check
      _
    $region19: #{tpu_custom_call.1} parent=1 // pred_check_branch
      %122 = sbr.rel (0) target = $region21
    $region20: #{tpu_custom_call.1} parent=1 // pred_region
      %s124 = ssub.s32 256, 256
      %125 = vsyncadd [#allocation4], %s124
      %s126 = sshll.u32 [#allocation7], 4
      %s127 = int_to_ptr.vmem [resolvable:$true] %s126
      %132 = dma.vmem_to_hbm [thread:$0]  %s127, 256, %s2, [#allocation4], 32, 32, 2
    $region21: #{tpu_custom_call.1} parent=1 // pred_fallthru
      _
    // Predicated region
    $region22: #{tpu_custom_call.1} parent=1 // pred_check
      _
    $region23: #{tpu_custom_call.1} parent=1 // pred_check_branch
      %134 = sbr.rel (0) target = $region25
    $region24: #{tpu_custom_call.1} parent=1 // pred_region
      %135 = dma.done [#allocation4], 256
    $region25: #{tpu_custom_call.1} parent=1 // pred_fallthru
      _
    %136 = vsyncpa [#allocation3], 1
    %137 = vsyncpa [#allocation6], 1
    %138 = vsyncpa [#allocation4], 1

</llo_original>
